<compile_context>
chip_gen: v7x
topology: tpu7x:2x2x1
jax: 0.10.0
libtpu: 0.0.40
codegen_flags: <defaults>
</compile_context>

<pallas_src>
import functools

import jax
import jax.numpy as jnp
from jax.experimental import pallas as pl
from jax.experimental.pallas import tpu as pltpu


def _sublane_align(dtype):
    """Sublane tile alignment for a dtype (f32 -> 8, bf16/f16 -> 16)."""
    return 8 * (4 // jnp.dtype(dtype).itemsize)


def _pick_tile(n, cap, align):
    """Largest aligned t <= cap that divides n; else largest aligned t <= cap.

    Non-dividing tiles are paired with a cdiv grid (+ masking where needed),
    so the fallback never produces a huge full-extent block.
    """
    cap = max(align, min(cap, n))
    cap -= cap % align
    for t in range(cap, 0, -align):
        if n % t == 0:
            return t
    return cap


def _row_tile_cap(m, align):
    """Cap row tiles at min(256, M//2) so the 'parallel' row axis has >= 2
    tiles whenever possible (keeps both v7x TensorCores busy)."""
    half = max(align, (m // 2) - (m // 2) % align)
    return min(256, half)


# ----------------------------------------------------------------------------
# Kernel 1: fused global average + max pooling over the spatial axis
# ----------------------------------------------------------------------------
def _pool_kernel(u_ref, o_ref, sum_acc, max_acc, *, inv_n, n_valid, tn,
                 mask_cols):
    j = pl.program_id(1)

    @pl.when(j == 0)
    def _():
        sum_acc[...] = jnp.zeros_like(sum_acc)
        max_acc[...] = jnp.full_like(max_acc, -jnp.inf)

    u = u_ref[...].astype(jnp.float32)                    # (tm, tn)
    if mask_cols:
        col = j * tn + jax.lax.broadcasted_iota(jnp.int32, u.shape, 1)
        valid = col < n_valid
        u_s = jnp.where(valid, u, 0.0)
        u_m = jnp.where(valid, u, -jnp.inf)
    else:
        u_s = u
        u_m = u

    # Lane-dense partial reduction: fold the tile's 128-lane column groups
    # together with pure VPU adds/max (no per-step XLU cross-lane reduce,
    # no width-1 masked stores).
    s = u_s[:, :128]
    m = u_m[:, :128]
    for q in range(1, tn // 128):
        sl = slice(q * 128, (q + 1) * 128)
        s = s + u_s[:, sl]
        m = jnp.maximum(m, u_m[:, sl])
    sum_acc[...] += s
    max_acc[...] = jnp.maximum(max_acc[...], m)

    @pl.when(j == pl.num_programs(1) - 1)
    def _():
        # Single cross-lane (XLU) reduce + scale, once per row tile.
        o_ref[...] = (jnp.sum(sum_acc[...], axis=-1, keepdims=True) * inv_n
                      + jnp.max(max_acc[...], axis=-1, keepdims=True))


def global_avg_plus_max_pool(u2d):
    """(M, N) -> (M, 1) f32: mean(row) + max(row)."""
    M, N = u2d.shape
    sub = _sublane_align(u2d.dtype)
    tm = _pick_tile(M, _row_tile_cap(M, sub), sub)
    tn = _pick_tile(N, 2048, 128)
    grid = (pl.cdiv(M, tm), pl.cdiv(N, tn))
    return pl.pallas_call(
        functools.partial(_pool_kernel, inv_n=1.0 / N, n_valid=N, tn=tn,
                          mask_cols=(N % tn != 0)),
        out_shape=jax.ShapeDtypeStruct((M, 1), jnp.float32),
        grid=grid,
        in_specs=[pl.BlockSpec((tm, tn), lambda i, j: (i, j))],
        out_specs=pl.BlockSpec((tm, 1), lambda i, j: (i, 0)),
        scratch_shapes=[pltpu.VMEM((tm, 128), jnp.float32),
                        pltpu.VMEM((tm, 128), jnp.float32)],
        compiler_params=pltpu.CompilerParams(
            dimension_semantics=("parallel", "arbitrary")),
    )(u2d)


# ----------------------------------------------------------------------------
# Kernel 2: broadcast the per-(b,c) gate back over the spatial axis
# ----------------------------------------------------------------------------
def _expand_kernel(g_ref, o_ref):
    o_ref[...] = jnp.broadcast_to(g_ref[...].astype(o_ref.dtype), o_ref.shape)


def expand_rows(gate_col, N, out_dtype):
    """(M, 1) f32 -> (M, N) out_dtype, broadcast along lanes."""
    M = gate_col.shape[0]
    sub = _sublane_align(out_dtype)
    tm = _pick_tile(M, _row_tile_cap(M, sub), sub)
    tn = _pick_tile(N, 2048, 128)
    grid = (pl.cdiv(M, tm), pl.cdiv(N, tn))
    return pl.pallas_call(
        _expand_kernel,
        out_shape=jax.ShapeDtypeStruct((M, N), out_dtype),
        grid=grid,
        in_specs=[pl.BlockSpec((tm, 1), lambda i, j: (i, 0))],
        out_specs=pl.BlockSpec((tm, tn), lambda i, j: (i, j)),
        compiler_params=pltpu.CompilerParams(
            dimension_semantics=("parallel", "parallel")),
    )(gate_col)


# ----------------------------------------------------------------------------
# Full forward pass
# ----------------------------------------------------------------------------
def global_se(U, w_squeeze, w_excitation):
    """U: (B, C, H, W); w_squeeze: (C//2, C, 1, 1); w_excitation: (C, C//2, 1, 1)."""
    B, C, H, W = U.shape
    M, N = B * C, H * W

    u2d = U.reshape(M, N)                                  # free view of NCHW
    z = global_avg_plus_max_pool(u2d).reshape(B, C)        # (B, C) = avg + max

    # Tiny SE MLP (a few KB) in plain XLA: cannot fill one MXU pass, and a
    # standalone pallas_call launch would dominate its cost.  dot_general
    # contracts the C axis directly -> no weight transposes.
    w1 = w_squeeze.reshape(C // 2, C).astype(jnp.float32)    # (Cout=C/2, Cin=C)
    w2 = w_excitation.reshape(C, C // 2).astype(jnp.float32)  # (Cout=C, Cin=C/2)
    h = jax.lax.dot_general(z, w1, (((1,), (1,)), ((), ())))  # (B, C//2)
    s = jax.lax.dot_general(h, w2, (((1,), (1,)), ((), ())))  # (B, C)
    gate = jax.nn.sigmoid(s)                                  # stable sigmoid

    out2d = expand_rows(gate.reshape(M, 1), N, U.dtype)       # (M, N)
    return out2d.reshape(B, C, H, W)


if __name__ == "__main__":
    B, C, H, W = 2, 64, 16, 16

    key = jax.random.PRNGKey(0)
    k_u, k_sq, k_ex = jax.random.split(key, 3)
    U = jax.random.normal(k_u, (B, C, H, W), jnp.float32)
    w_squeeze = 0.1 * jax.random.normal(k_sq, (C // 2, C, 1, 1), jnp.float32)
    w_excitation = 0.1 * jax.random.normal(k_ex, (C, C // 2, 1, 1), jnp.float32)

    fwd = jax.jit(global_se)
    out = fwd(U, w_squeeze, w_excitation)
    jax.block_until_ready(out)
    assert out.shape == (B, C, H, W)

    # Pure-JAX reference of the PyTorch forward.
    z_ref = (jnp.mean(U, axis=(2, 3), keepdims=True)
             + jnp.max(U, axis=(2, 3), keepdims=True))
    z_ref = jnp.einsum("bcij,oc->boij", z_ref, w_squeeze.reshape(C // 2, C))
    z_ref = jnp.einsum("bcij,oc->boij", z_ref, w_excitation.reshape(C, C // 2))
    ref = jnp.broadcast_to(jax.nn.sigmoid(z_ref), U.shape)

    err = float(jnp.max(jnp.abs(out - ref)))
    assert jnp.allclose(out, ref, atol=1e-5, rtol=1e-5), err
    print("KERNEL_OK")
</pallas_src>

<mosaic_0001>
module attributes {stable_mosaic.version = 11 : i64} {
  func.func @_pool_kernel(%arg0: i32, %arg1: i32, %arg2: memref<64x256xf32, #tpu.memory_space<vmem>>, %arg3: memref<64x1xf32, #tpu.memory_space<vmem>>, %arg4: memref<64x128xf32, #tpu.memory_space<vmem>>, %arg5: memref<64x128xf32, #tpu.memory_space<vmem>>) attributes {dimension_semantics = [#tpu.dimension_semantics<parallel>, #tpu.dimension_semantics<arbitrary>], iteration_bounds = array<i64: 2, 1>, scalar_prefetch = 0 : i64, scratch_operands = 2 : i64, tpu.core_type = #tpu.core_type<tc>, window_params = [{transform_indices = @transform_0, window_bounds = array<i64: 64, 256>}, {transform_indices = @transform_1, window_bounds = array<i64: 64, 1>}]} {
    %c0_i32 = arith.constant 0 : i32
    %0 = arith.cmpi eq, %arg1, %c0_i32 : i32
    %1 = arith.extui %0 : i1 to i32
    %c0_i32_0 = arith.constant 0 : i32
    %2 = arith.cmpi ne, %1, %c0_i32_0 : i32
    scf.if %2 {
      %cst = arith.constant 0.000000e+00 : f32
      %19 = vector.broadcast %cst : f32 to vector<64x128xf32>
      %c0_12 = arith.constant 0 : index
      %c0_13 = arith.constant 0 : index
      %20 = vector.load %arg4[%c0_12, %c0_13] : memref<64x128xf32, #tpu.memory_space<vmem>>, vector<64x128xf32>
      tpu.vector_store %arg4[%c0_12, %c0_13], %19 {strides = array<i32>} : memref<64x128xf32, #tpu.memory_space<vmem>>, vector<64x128xf32>,
      %cst_14 = arith.constant 0xFF800000 : f32
      %21 = vector.broadcast %cst_14 : f32 to vector<64x128xf32>
      %c0_15 = arith.constant 0 : index
      %c0_16 = arith.constant 0 : index
      %22 = vector.load %arg5[%c0_15, %c0_16] : memref<64x128xf32, #tpu.memory_space<vmem>>, vector<64x128xf32>
      tpu.vector_store %arg5[%c0_15, %c0_16], %21 {strides = array<i32>} : memref<64x128xf32, #tpu.memory_space<vmem>>, vector<64x128xf32>,
    } else {
    }
    %c0 = arith.constant 0 : index
    %c0_1 = arith.constant 0 : index
    %3 = vector.load %arg2[%c0, %c0_1] : memref<64x256xf32, #tpu.memory_space<vmem>>, vector<64x256xf32>
    %4 = vector.extract_strided_slice %3 {offsets = [0, 0], sizes = [64, 128], strides = [1, 1]} : vector<64x256xf32> to vector<64x128xf32>
    %5 = vector.extract_strided_slice %3 {offsets = [0, 0], sizes = [64, 128], strides = [1, 1]} : vector<64x256xf32> to vector<64x128xf32>
    %6 = vector.extract_strided_slice %3 {offsets = [0, 128], sizes = [64, 128], strides = [1, 1]} : vector<64x256xf32> to vector<64x128xf32>
    %7 = arith.addf %4, %6 : vector<64x128xf32>
    %8 = vector.extract_strided_slice %3 {offsets = [0, 128], sizes = [64, 128], strides = [1, 1]} : vector<64x256xf32> to vector<64x128xf32>
    %9 = arith.maximumf %5, %8 : vector<64x128xf32>
    %c0_2 = arith.constant 0 : index
    %c0_3 = arith.constant 0 : index
    %10 = vector.load %arg4[%c0_2, %c0_3] : memref<64x128xf32, #tpu.memory_space<vmem>>, vector<64x128xf32>
    %11 = arith.addf %10, %7 : vector<64x128xf32>
    %c0_4 = arith.constant 0 : index
    %c0_5 = arith.constant 0 : index
    %12 = vector.load %arg4[%c0_4, %c0_5] : memref<64x128xf32, #tpu.memory_space<vmem>>, vector<64x128xf32>
    tpu.vector_store %arg4[%c0_4, %c0_5], %11 {strides = array<i32>} : memref<64x128xf32, #tpu.memory_space<vmem>>, vector<64x128xf32>,
    %c0_6 = arith.constant 0 : index
    %c0_7 = arith.constant 0 : index
    %13 = vector.load %arg5[%c0_6, %c0_7] : memref<64x128xf32, #tpu.memory_space<vmem>>, vector<64x128xf32>
    %14 = arith.maximumf %13, %9 : vector<64x128xf32>
    %c0_8 = arith.constant 0 : index
    %c0_9 = arith.constant 0 : index
    %15 = vector.load %arg5[%c0_8, %c0_9] : memref<64x128xf32, #tpu.memory_space<vmem>>, vector<64x128xf32>
    tpu.vector_store %arg5[%c0_8, %c0_9], %14 {strides = array<i32>} : memref<64x128xf32, #tpu.memory_space<vmem>>, vector<64x128xf32>,
    %c0_i32_10 = arith.constant 0 : i32
    %16 = arith.cmpi eq, %arg1, %c0_i32_10 : i32
    %17 = arith.extui %16 : i1 to i32
    %c0_i32_11 = arith.constant 0 : i32
    %18 = arith.cmpi ne, %17, %c0_i32_11 : i32
    scf.if %18 {
      %c0_12 = arith.constant 0 : index
      %c0_13 = arith.constant 0 : index
      %19 = vector.load %arg4[%c0_12, %c0_13] : memref<64x128xf32, #tpu.memory_space<vmem>>, vector<64x128xf32>
      %cst = arith.constant dense<0.000000e+00> : vector<64xf32>
      %20 = vector.multi_reduction <add>, %19, %cst [1] : vector<64x128xf32> to vector<64xf32>
      %21 = vector.shape_cast %20 : vector<64xf32> to vector<64x1xf32>
      %cst_14 = arith.constant 3.906250e-03 : f32
      %22 = vector.broadcast %cst_14 : f32 to vector<64x1xf32>
      %23 = arith.mulf %21, %22 : vector<64x1xf32>
      %c0_15 = arith.constant 0 : index
      %c0_16 = arith.constant 0 : index
      %24 = vector.load %arg5[%c0_15, %c0_16] : memref<64x128xf32, #tpu.memory_space<vmem>>, vector<64x128xf32>
      %cst_17 = arith.constant dense<0xFF800000> : vector<64xf32>
      %25 = vector.multi_reduction <maximumf>, %24, %cst_17 [1] : vector<64x128xf32> to vector<64xf32>
      %26 = vector.shape_cast %25 : vector<64xf32> to vector<64x1xf32>
      %27 = arith.addf %23, %26 : vector<64x1xf32>
      %c0_18 = arith.constant 0 : index
      %c0_19 = arith.constant 0 : index
      %28 = vector.load %arg3[%c0_18, %c0_19] : memref<64x1xf32, #tpu.memory_space<vmem>>, vector<64x1xf32>
      tpu.vector_store %arg3[%c0_18, %c0_19], %27 {strides = array<i32>} : memref<64x1xf32, #tpu.memory_space<vmem>>, vector<64x1xf32>,
    } else {
    }
    return
  }
  func.func @transform_0(%arg0: i32, %arg1: i32) -> (i32, i32) {
    %c0_i32 = arith.constant 0 : i32
    return %arg0, %arg1 : i32, i32
  }
  func.func @transform_1(%arg0: i32, %arg1: i32) -> (i32, i32) {
    %c0_i32 = arith.constant 0 : i32
    %c0_i32_0 = arith.constant 0 : i32
    return %arg0, %c0_i32 : i32, i32
  }
}

module attributes {stable_mosaic.version = 11 : i64} {
  func.func @_expand_kernel(%arg0: i32, %arg1: i32, %arg2: memref<64x1xf32, #tpu.memory_space<vmem>>, %arg3: memref<64x256xf32, #tpu.memory_space<vmem>>) attributes {dimension_semantics = [#tpu.dimension_semantics<parallel>, #tpu.dimension_semantics<parallel>], iteration_bounds = array<i64: 2, 1>, scalar_prefetch = 0 : i64, scratch_operands = 0 : i64, tpu.core_type = #tpu.core_type<tc>, window_params = [{transform_indices = @transform_0, window_bounds = array<i64: 64, 1>}, {transform_indices = @transform_1, window_bounds = array<i64: 64, 256>}]} {
    %c0 = arith.constant 0 : index
    %c0_0 = arith.constant 0 : index
    %0 = vector.load %arg2[%c0, %c0_0] : memref<64x1xf32, #tpu.memory_space<vmem>>, vector<64x1xf32>
    %1 = vector.shape_cast %0 : vector<64x1xf32> to vector<64x1xf32>
    %2 = vector.broadcast %1 : vector<64x1xf32> to vector<64x256xf32>
    %c0_1 = arith.constant 0 : index
    %c0_2 = arith.constant 0 : index
    %3 = vector.load %arg3[%c0_1, %c0_2] : memref<64x256xf32, #tpu.memory_space<vmem>>, vector<64x256xf32>
    tpu.vector_store %arg3[%c0_1, %c0_2], %2 {strides = array<i32>} : memref<64x256xf32, #tpu.memory_space<vmem>>, vector<64x256xf32>,
    return
  }
  func.func @transform_0(%arg0: i32, %arg1: i32) -> (i32, i32) {
    %c0_i32 = arith.constant 0 : i32
    %c0_i32_0 = arith.constant 0 : i32
    return %arg0, %c0_i32 : i32, i32
  }
  func.func @transform_1(%arg0: i32, %arg1: i32) -> (i32, i32) {
    %c0_i32 = arith.constant 0 : i32
    return %arg0, %arg1 : i32, i32
  }
}

</mosaic_0001>

<llo_original>
// kernel: global_se.2
$region0: #{global_se.2}
  #allocation0 [shape = 'u32[]', space=smem, size = 0x4, offset = 0x4, fixed_abs, tag = 'smem constant byte address 0x4 - core index']
  #allocation1 [shape = 'u32[144,128]{1,0:T(1,128)}', space=vmem, size = 0x12000, scoped, tag = 'internal scratch']
  #allocation2 [shape = 'f32[64,128]{1,0:T(8,128)}', space=vmem, size = 0x8000, scoped, tag = 'scratch operand']
  #allocation3 [shape = 'f32[64,128]{1,0:T(8,128)}', space=vmem, size = 0x8000, scoped, tag = 'scratch operand']
  %s0 = inlined_call_operand.vmem [shape: f32[128,256], index: 0, kind: input, shape index: {}]
  %s1 = inlined_call_operand.vmem [shape: f32[128,1], index: 1, kind: output, shape index: {}]
  %s2 = sld [smem:[#allocation0]]
  $region45: #{global_se.2} parent=0
    _
  %s4 = ssub.s32 1, %s2
  %s5 = scalar_select 0, %s4, %s2
  loop: start=0, step=1, limit=4
  $region2: #{global_se.2} parent=0 // loop_pre_header
    _
  $region3: #{global_se.2} parent=0 // loop_header
    %s7 = sphi 0, %s11
    %p8 = scmp.ge.s32.totalorder %s7, 4
    %s14 = sphi 0, %s26
    %s15 = sphi 0, %s22
    %s16 = sphi 0, %s14
    %s17 = sphi 0, %s15
    %s18 = sphi 0, %s16
    %s19 = sphi 0, %s17
    %s31 = sphi 0, %s33
    %s34 = sphi 0, %s31
    %s35 = sphi 0, %s34
    %s51 = sphi 0, %s35
    %s57 = sphi 0, %s59
    %s60 = sphi 0, %s57
    %s61 = sphi 0, %s60
    %s77 = sphi 0, %s61
  $region4: #{global_se.2} parent=0 // loop_header_branch
    %10 = sbr.rel (%p8) target = $region8
  $region5: #{global_se.2} parent=0 // loop_body
    %s12 = ssub.s32 %s7, 1
    %s13 = ssub.s32 %s7, 2
    %s20 = sadd.s32 1, %s15
    %p21 = scmp.ge.s32.totalorder %s20, 1
    %s22 = scalar_select %p21, 0, %s20
    %s23 = sadd.s32 1, %s14
    %s24 = scalar_select %p21, %s23, %s14
    %p25 = scmp.ge.s32.totalorder %s24, 2
    %s26 = scalar_select %p25, 0, %s24
    %s27 = ssub.s32 %s14, %s26
    %s28 = ssub.s32 %s15, %s22
    %s29 = sor.u32 %s27, %s28
    %p30 = scmp.eq.s32.totalorder %s29, 0
    %s32 = sadd.s32 %s31, 1
    %s33 = scalar_select %p30, %s31, %s32
    %p36 = pneg %p30
    %p37 = scmp.eq.s32.totalorder %s7, 1
    %p38 = por %p36, %p37
    %p39 = scmp.ne.s32.totalorder %s31, %s34
    %p40 = scmp.eq.s32.totalorder %s7, 0
    %p41 = por %p39, %p40
    %p42 = scmp.ne.s32.totalorder %s31, %s34
    %p43 = scmp.eq.s32.totalorder %s12, 1
    %p44 = por %p42, %p43
    %p45 = scmp.ne.s32.totalorder %s34, %s35
    %p46 = scmp.eq.s32.totalorder %s12, 0
    %p47 = por %p45, %p46
    %p48 = scmp.ne.s32.totalorder %s34, %s35
    %p49 = scmp.eq.s32.totalorder %s13, 1
    %p50 = por %p48, %p49
    %p52 = scmp.ne.s32.totalorder %s35, %s51
    %p53 = scmp.eq.s32.totalorder %s13, 0
    %p54 = por %p52, %p53
    %s55 = ssub.s32 %s14, %s26
    %p56 = scmp.eq.s32.totalorder %s55, 0
    %s58 = sadd.s32 %s57, 1
    %s59 = scalar_select %p56, %s57, %s58
    %p62 = pneg %p56
    %p63 = scmp.eq.s32.totalorder %s7, 1
    %p64 = por %p62, %p63
    %p65 = scmp.ne.s32.totalorder %s57, %s60
    %p66 = scmp.eq.s32.totalorder %s7, 0
    %p67 = por %p65, %p66
    %p68 = scmp.ne.s32.totalorder %s57, %s60
    %p69 = scmp.eq.s32.totalorder %s12, 1
    %p70 = por %p68, %p69
    %p71 = scmp.ne.s32.totalorder %s60, %s61
    %p72 = scmp.eq.s32.totalorder %s12, 0
    %p73 = por %p71, %p72
    %p74 = scmp.ne.s32.totalorder %s60, %s61
    %p75 = scmp.eq.s32.totalorder %s13, 1
    %p76 = por %p74, %p75
    %p78 = scmp.ne.s32.totalorder %s61, %s77
    %p79 = scmp.eq.s32.totalorder %s13, 0
    %p80 = por %p78, %p79
    %p81 = scmp.le.s32.totalorder 1, %s7
    %p82 = scmp.lt.s32.totalorder %s7, 3
    %p83 = pnand %p81, %p82
    %p84 = pneg %p83
    // Predicated region
    $region9: #{global_se.2} parent=5 // pred_check
      _
    $region10: #{global_se.2} parent=5 // pred_check_branch
      %86 = sbr.rel (%p83) target = $region12
    $region11: #{global_se.2} parent=5 // pred_region
      %s87 = ssub.s32 %s7, 1
    $region12: #{global_se.2} parent=5 // pred_fallthru
      _
    %p88 = scmp.lt.s32.totalorder %s7, 2
    // Predicated region
    $region13: #{global_se.2} parent=5 // pred_check
      %p89 = pneg %p88
    $region14: #{global_se.2} parent=5 // pred_check_branch
      %91 = sbr.rel (%p89) target = $region16
    $region15: #{global_se.2} parent=5 // pred_region
      // Predicated region
      $region17: #{global_se.2} parent=15 // pred_check
        %p92 = pneg %p41
      $region18: #{global_se.2} parent=15 // pred_check_branch
        %94 = sbr.rel (%p92) target = $region20
      $region19: #{global_se.2} parent=15 // pred_region
        %s95 = smul.u32 8, %s14
        %s96 = smul.u32 2, %s15
        %p97 = scmp.lt.s32.totalorder %s95, 15
        %s98 = scalar_select %p97, %s95, 15
        %p99 = scmp.lt.s32.totalorder %s96, 1
        %s100 = scalar_select %p99, %s96, 1
        %s101 = smul.addr %s98, 2
        %s102 = sadd.s32 %s100, %s101
        %s103 = smul.addr %s102, 8
        %s104 = scalar_lea.vmem %s0, %s103
        %s105 = smul.u32 8, %s14
        %s106 = smul.u32 2, %s15
      $region20: #{global_se.2} parent=15 // pred_fallthru
        _
    $region16: #{global_se.2} parent=5 // pred_fallthru
      _
    %p107 = scmp.le.s32.totalorder 1, %s7
    %p108 = scmp.lt.s32.totalorder %s7, 3
    %p109 = pnand %p107, %p108
    %p110 = pneg %p109
    // Predicated region
    $region21: #{global_se.2} parent=5 // pred_check
      _
    $region22: #{global_se.2} parent=5 // pred_check_branch
      %112 = sbr.rel (%p109) target = $region24
    $region23: #{global_se.2} parent=5 // pred_region
      %s113 = ssub.s32 %s7, 1
      %s114 = smul.u32 8, %s16
      %s115 = smul.u32 2, %s17
      %p116 = scmp.lt.s32.totalorder %s114, 15
      %s117 = scalar_select %p116, %s114, 15
      %p118 = scmp.lt.s32.totalorder %s115, 1
      %s119 = scalar_select %p118, %s115, 1
      %s120 = smul.addr %s117, 2
      %s121 = sadd.s32 %s119, %s120
      %s122 = smul.addr %s121, 8
      %s123 = scalar_lea.vmem %s0, %s122
      %p124 = pneg %p47
      %p125 = pneg %p44
      %p126 = pneg %p73
      %p127 = pneg %p70
      %s128 = smul.u32 8, %s16
      %p129 = scmp.lt.s32.totalorder %s128, 15
      %s130 = scalar_select %p129, %s128, 15
      %s131 = smul.addr %s130, 8
      %s132 = scalar_lea.vmem %s1, %s131
      %s133 = smul.u32 8, %s16
      %s134 = smul.u32 2, %s17
      %p135 = scmp.lt.s32.totalorder %s133, 15
      %s136 = scalar_select %p135, %s133, 15
      %p137 = scmp.lt.s32.totalorder %s134, 1
      %s138 = scalar_select %p137, %s134, 1
      %s139 = smul.addr %s136, 2
      %s140 = sadd.s32 %s138, %s139
      %s141 = smul.addr %s140, 8
      %s142 = scalar_lea.vmem %s0, %s141
      %s143 = smul.u32 8, %s16
      %s144 = smul.u32 2, %s17
      %s145 = smul.u32 8, %s16
      %p146 = scmp.lt.s32.totalorder %s145, 15
      %s147 = scalar_select %p146, %s145, 15
      %s148 = smul.addr %s147, 8
      %s149 = scalar_lea.vmem %s1, %s148
      %s150 = smul.u32 8, %s16
      %p151 = scmp.eq.s32.totalorder %s17, 0
      // Predicated region
      $region25: #{global_se.2} parent=23 // pred_check
        %p152 = pneg %p151
      $region26: #{global_se.2} parent=23 // pred_check_branch
        %154 = sbr.rel (%p152) target = $region28
      $region27: #{global_se.2} parent=23 // pred_region
        %155 = vst [vmem:[#allocation2] sm:$0xff] 0.0
        %156 = vst [vmem:[#allocation2 + $0x8] sm:$0xff] 0.0
        %157 = vst [vmem:[#allocation2 + $0x10] sm:$0xff] 0.0
        %158 = vst [vmem:[#allocation2 + $0x18] sm:$0xff] 0.0
        %159 = vst [vmem:[#allocation2 + $0x20] sm:$0xff] 0.0
        %160 = vst [vmem:[#allocation2 + $0x28] sm:$0xff] 0.0
        %161 = vst [vmem:[#allocation2 + $0x30] sm:$0xff] 0.0
        %162 = vst [vmem:[#allocation2 + $0x38] sm:$0xff] 0.0
        %163 = vst [vmem:[#allocation3] sm:$0xff] -inf
        %164 = vst [vmem:[#allocation3 + $0x8] sm:$0xff] -inf
        %165 = vst [vmem:[#allocation3 + $0x10] sm:$0xff] -inf
        %166 = vst [vmem:[#allocation3 + $0x18] sm:$0xff] -inf
        %167 = vst [vmem:[#allocation3 + $0x20] sm:$0xff] -inf
        %168 = vst [vmem:[#allocation3 + $0x28] sm:$0xff] -inf
        %169 = vst [vmem:[#allocation3 + $0x30] sm:$0xff] -inf
        %170 = vst [vmem:[#allocation3 + $0x38] sm:$0xff] -inf
      $region28: #{global_se.2} parent=23 // pred_fallthru
        _
      %v171 = vld [vmem:[%s142] sm:$0xff]
      %v172 = vld [vmem:[%s142 + $0x8] sm:$0xff]
      %v173 = vld [vmem:[%s142 + $0x10] sm:$0xff]
      %v174 = vld [vmem:[%s142 + $0x18] sm:$0xff]
      %v175 = vld [vmem:[%s142 + $0x20] sm:$0xff]
      %v176 = vld [vmem:[%s142 + $0x28] sm:$0xff]
      %v177 = vld [vmem:[%s142 + $0x30] sm:$0xff]
      %v178 = vld [vmem:[%s142 + $0x38] sm:$0xff]
      %v179 = vld [vmem:[%s142 + $0x40] sm:$0xff]
      %v180 = vld [vmem:[%s142 + $0x48] sm:$0xff]
      %v181 = vld [vmem:[%s142 + $0x50] sm:$0xff]
      %v182 = vld [vmem:[%s142 + $0x58] sm:$0xff]
      %v183 = vld [vmem:[%s142 + $0x60] sm:$0xff]
      %v184 = vld [vmem:[%s142 + $0x68] sm:$0xff]
      %v185 = vld [vmem:[%s142 + $0x70] sm:$0xff]
      %v186 = vld [vmem:[%s142 + $0x78] sm:$0xff]
      %v187 = vadd.f32 %v171, %v172
      %v188 = vadd.f32 %v173, %v174
      %v189 = vadd.f32 %v175, %v176
      %v190 = vadd.f32 %v177, %v178
      %v191 = vadd.f32 %v179, %v180
      %v192 = vadd.f32 %v181, %v182
      %v193 = vadd.f32 %v183, %v184
      %v194 = vadd.f32 %v185, %v186
      %v195 = vmax.f32 %v171, %v172
      %v196 = vmax.f32 %v173, %v174
      %v197 = vmax.f32 %v175, %v176
      %v198 = vmax.f32 %v177, %v178
      %v199 = vmax.f32 %v179, %v180
      %v200 = vmax.f32 %v181, %v182
      %v201 = vmax.f32 %v183, %v184
      %v202 = vmax.f32 %v185, %v186
      %v203 = vld [vmem:[#allocation2] sm:$0xff]
      %v204 = vld [vmem:[#allocation2 + $0x8] sm:$0xff]
      %v205 = vld [vmem:[#allocation2 + $0x10] sm:$0xff]
      %v206 = vld [vmem:[#allocation2 + $0x18] sm:$0xff]
      %v207 = vld [vmem:[#allocation2 + $0x20] sm:$0xff]
      %v208 = vld [vmem:[#allocation2 + $0x28] sm:$0xff]
      %v209 = vld [vmem:[#allocation2 + $0x30] sm:$0xff]
      %v210 = vld [vmem:[#allocation2 + $0x38] sm:$0xff]
      %v211 = vadd.f32 %v203, %v187
      %v212 = vadd.f32 %v204, %v188
      %v213 = vadd.f32 %v205, %v189
      %v214 = vadd.f32 %v206, %v190
      %v215 = vadd.f32 %v207, %v191
      %v216 = vadd.f32 %v208, %v192
      %v217 = vadd.f32 %v209, %v193
      %v218 = vadd.f32 %v210, %v194
      %219 = vst [vmem:[#allocation2] sm:$0xff] %v211
      %220 = vst [vmem:[#allocation2 + $0x8] sm:$0xff] %v212
      %221 = vst [vmem:[#allocation2 + $0x10] sm:$0xff] %v213
      %222 = vst [vmem:[#allocation2 + $0x18] sm:$0xff] %v214
      %223 = vst [vmem:[#allocation2 + $0x20] sm:$0xff] %v215
      %224 = vst [vmem:[#allocation2 + $0x28] sm:$0xff] %v216
      %225 = vst [vmem:[#allocation2 + $0x30] sm:$0xff] %v217
      %226 = vst [vmem:[#allocation2 + $0x38] sm:$0xff] %v218
      %v227 = vld [vmem:[#allocation3] sm:$0xff]
      %v228 = vld [vmem:[#allocation3 + $0x8] sm:$0xff]
      %v229 = vld [vmem:[#allocation3 + $0x10] sm:$0xff]
      %v230 = vld [vmem:[#allocation3 + $0x18] sm:$0xff]
      %v231 = vld [vmem:[#allocation3 + $0x20] sm:$0xff]
      %v232 = vld [vmem:[#allocation3 + $0x28] sm:$0xff]
      %v233 = vld [vmem:[#allocation3 + $0x30] sm:$0xff]
      %v234 = vld [vmem:[#allocation3 + $0x38] sm:$0xff]
      %v235 = vmax.f32 %v227, %v195
      %v236 = vmax.f32 %v228, %v196
      %v237 = vmax.f32 %v229, %v197
      %v238 = vmax.f32 %v230, %v198
      %v239 = vmax.f32 %v231, %v199
      %v240 = vmax.f32 %v232, %v200
      %v241 = vmax.f32 %v233, %v201
      %v242 = vmax.f32 %v234, %v202
      %243 = vst [vmem:[#allocation3] sm:$0xff] %v235
      %244 = vst [vmem:[#allocation3 + $0x8] sm:$0xff] %v236
      %245 = vst [vmem:[#allocation3 + $0x10] sm:$0xff] %v237
      %246 = vst [vmem:[#allocation3 + $0x18] sm:$0xff] %v238
      %247 = vst [vmem:[#allocation3 + $0x20] sm:$0xff] %v239
      %248 = vst [vmem:[#allocation3 + $0x28] sm:$0xff] %v240
      %249 = vst [vmem:[#allocation3 + $0x30] sm:$0xff] %v241
      %250 = vst [vmem:[#allocation3 + $0x38] sm:$0xff] %v242
      // Predicated region
      $region29: #{global_se.2} parent=23 // pred_check
        %p251 = pneg %p151
      $region30: #{global_se.2} parent=23 // pred_check_branch
        %253 = sbr.rel (%p251) target = $region32
      $region31: #{global_se.2} parent=23 // pred_region
        %v254 = vld [vmem:[#allocation2] sm:$0xff]
        %v255 = vld [vmem:[#allocation2 + $0x8] sm:$0xff]
        %v256 = vld [vmem:[#allocation2 + $0x10] sm:$0xff]
        %v257 = vld [vmem:[#allocation2 + $0x18] sm:$0xff]
        %v258 = vld [vmem:[#allocation2 + $0x20] sm:$0xff]
        %v259 = vld [vmem:[#allocation2 + $0x28] sm:$0xff]
        %v260 = vld [vmem:[#allocation2 + $0x30] sm:$0xff]
        %v261 = vld [vmem:[#allocation2 + $0x38] sm:$0xff]
        %262 = vadd.xlane.f32.xlu0 %v254
        %v263 = vpop.xlane.xlu0 %262
        %264 = vadd.xlane.f32.xlu0 %v255
        %v265 = vpop.xlane.xlu0 %264
        %266 = vadd.xlane.f32.xlu0 %v256
        %v267 = vpop.xlane.xlu0 %266
        %268 = vadd.xlane.f32.xlu0 %v257
        %v269 = vpop.xlane.xlu0 %268
        %270 = vadd.xlane.f32.xlu0 %v258
        %v271 = vpop.xlane.xlu0 %270
        %272 = vadd.xlane.f32.xlu0 %v259
        %v273 = vpop.xlane.xlu0 %272
        %274 = vadd.xlane.f32.xlu0 %v260
        %v275 = vpop.xlane.xlu0 %274
        %276 = vadd.xlane.f32.xlu0 %v261
        %v277 = vpop.xlane.xlu0 %276
        %v278 = vmul.f32 %v263, 0.00390625
        %v279 = vmul.f32 %v265, 0.00390625
        %v280 = vmul.f32 %v267, 0.00390625
        %v281 = vmul.f32 %v269, 0.00390625
        %v282 = vmul.f32 %v271, 0.00390625
        %v283 = vmul.f32 %v273, 0.00390625
        %v284 = vmul.f32 %v275, 0.00390625
        %v285 = vmul.f32 %v277, 0.00390625
        %v286 = vld [vmem:[#allocation3] sm:$0xff]
        %v287 = vld [vmem:[#allocation3 + $0x8] sm:$0xff]
        %v288 = vld [vmem:[#allocation3 + $0x10] sm:$0xff]
        %v289 = vld [vmem:[#allocation3 + $0x18] sm:$0xff]
        %v290 = vld [vmem:[#allocation3 + $0x20] sm:$0xff]
        %v291 = vld [vmem:[#allocation3 + $0x28] sm:$0xff]
        %v292 = vld [vmem:[#allocation3 + $0x30] sm:$0xff]
        %v293 = vld [vmem:[#allocation3 + $0x38] sm:$0xff]
        %294 = vmax.xlane.f32.xlu0 %v286
        %v295 = vpop.xlane.xlu0 %294
        %296 = vmax.xlane.f32.xlu0 %v287
        %v297 = vpop.xlane.xlu0 %296
        %298 = vmax.xlane.f32.xlu0 %v288
        %v299 = vpop.xlane.xlu0 %298
        %300 = vmax.xlane.f32.xlu0 %v289
        %v301 = vpop.xlane.xlu0 %300
        %302 = vmax.xlane.f32.xlu0 %v290
        %v303 = vpop.xlane.xlu0 %302
        %304 = vmax.xlane.f32.xlu0 %v291
        %v305 = vpop.xlane.xlu0 %304
        %306 = vmax.xlane.f32.xlu0 %v292
        %v307 = vpop.xlane.xlu0 %306
        %308 = vmax.xlane.f32.xlu0 %v293
        %v309 = vpop.xlane.xlu0 %308
        %v310 = vadd.f32 %v278, %v295
        %v311 = vadd.f32 %v279, %v297
        %v312 = vadd.f32 %v280, %v299
        %v313 = vadd.f32 %v281, %v301
        %v314 = vadd.f32 %v282, %v303
        %v315 = vadd.f32 %v283, %v305
        %v316 = vadd.f32 %v284, %v307
        %v317 = vadd.f32 %v285, %v309
        %vm318 = vcmask 7168
        %319 = vst.msk [vmem:[%s149] sm:$0xff] %vm318, %v310
        %320 = vst.msk [vmem:[%s149 + $0x8] sm:$0xff] %vm318, %v311
        %321 = vst.msk [vmem:[%s149 + $0x10] sm:$0xff] %vm318, %v312
        %322 = vst.msk [vmem:[%s149 + $0x18] sm:$0xff] %vm318, %v313
        %323 = vst.msk [vmem:[%s149 + $0x20] sm:$0xff] %vm318, %v314
        %324 = vst.msk [vmem:[%s149 + $0x28] sm:$0xff] %vm318, %v315
        %325 = vst.msk [vmem:[%s149 + $0x30] sm:$0xff] %vm318, %v316
        %326 = vst.msk [vmem:[%s149 + $0x38] sm:$0xff] %vm318, %v317
      $region32: #{global_se.2} parent=23 // pred_fallthru
        _
      %s327 = smul.u32 8, %s16
      %p328 = scmp.lt.s32.totalorder %s327, 15
      %s329 = scalar_select %p328, %s327, 15
      %s330 = smul.addr %s329, 8
      %s331 = scalar_lea.vmem %s1, %s330
      // Predicated region
      $region33: #{global_se.2} parent=23 // pred_check
        %p332 = pneg %p70
      $region34: #{global_se.2} parent=23 // pred_check_branch
        %334 = sbr.rel (%p332) target = $region36
      $region35: #{global_se.2} parent=23 // pred_region
        %s335 = smul.u32 8, %s16
      $region36: #{global_se.2} parent=23 // pred_fallthru
        _
    $region24: #{global_se.2} parent=5 // pred_fallthru
      _
    %p336 = scmp.le.s32.totalorder 2, %s7
    // Predicated region
    $region37: #{global_se.2} parent=5 // pred_check
      %p337 = pneg %p336
    $region38: #{global_se.2} parent=5 // pred_check_branch
      %339 = sbr.rel (%p337) target = $region40
    $region39: #{global_se.2} parent=5 // pred_region
      %s340 = ssub.s32 %s7, 2
      // Predicated region
      $region41: #{global_se.2} parent=39 // pred_check
        %p341 = pneg %p76
      $region42: #{global_se.2} parent=39 // pred_check_branch
        %343 = sbr.rel (%p341) target = $region44
      $region43: #{global_se.2} parent=39 // pred_region
        %s344 = smul.u32 8, %s18
        %p345 = scmp.lt.s32.totalorder %s344, 15
        %s346 = scalar_select %p345, %s344, 15
        %s347 = smul.addr %s346, 8
        %s348 = scalar_lea.vmem %s1, %s347
      $region44: #{global_se.2} parent=39 // pred_fallthru
        _
    $region40: #{global_se.2} parent=5 // pred_fallthru
      _
  $region6: #{global_se.2} parent=0 // loop_footer
    %s11 = sadd.s32 1, %s7
  $region7: #{global_se.2} parent=0 // loop_footer_branch
    %6 = sbr.rel target = $region3
  $region8: #{global_se.2} parent=0 // loop_exit
    _

// kernel: global_se.3
$region0: #{global_se.3}
  #allocation0 [shape = 'u32[]', space=smem, size = 0x4, offset = 0x4, fixed_abs, tag = 'smem constant byte address 0x4 - core index']
  #allocation1 [shape = 'u32[144,128]{1,0:T(1,128)}', space=vmem, size = 0x12000, scoped, tag = 'internal scratch']
  %s0 = inlined_call_operand.vmem [shape: f32[128,1], index: 0, kind: input, shape index: {}]
  %s1 = inlined_call_operand.vmem [shape: f32[128,256], index: 1, kind: output, shape index: {}]
  %s2 = sld [smem:[#allocation0]]
  $region37: #{global_se.3} parent=0
    _
  %s4 = ssub.s32 1, %s2
  %s5 = scalar_select 0, %s4, %s2
  loop: start=0, step=1, limit=4
  $region2: #{global_se.3} parent=0 // loop_pre_header
    _
  $region3: #{global_se.3} parent=0 // loop_header
    %s7 = sphi 0, %s11
    %p8 = scmp.ge.s32.totalorder %s7, 4
    %s14 = sphi 0, %s26
    %s15 = sphi 0, %s22
    %s16 = sphi 0, %s14
    %s17 = sphi 0, %s15
    %s18 = sphi 0, %s16
    %s19 = sphi 0, %s17
    %s29 = sphi 0, %s31
    %s32 = sphi 0, %s29
    %s33 = sphi 0, %s32
    %s49 = sphi 0, %s33
    %s57 = sphi 0, %s59
    %s60 = sphi 0, %s57
    %s61 = sphi 0, %s60
    %s77 = sphi 0, %s61
  $region4: #{global_se.3} parent=0 // loop_header_branch
    %10 = sbr.rel (%p8) target = $region8
  $region5: #{global_se.3} parent=0 // loop_body
    %s12 = ssub.s32 %s7, 1
    %s13 = ssub.s32 %s7, 2
    %s20 = sadd.s32 1, %s15
    %p21 = scmp.ge.s32.totalorder %s20, 1
    %s22 = scalar_select %p21, 0, %s20
    %s23 = sadd.s32 1, %s14
    %s24 = scalar_select %p21, %s23, %s14
    %p25 = scmp.ge.s32.totalorder %s24, 2
    %s26 = scalar_select %p25, 0, %s24
    %s27 = ssub.s32 %s14, %s26
    %p28 = scmp.eq.s32.totalorder %s27, 0
    %s30 = sadd.s32 %s29, 1
    %s31 = scalar_select %p28, %s29, %s30
    %p34 = pneg %p28
    %p35 = scmp.eq.s32.totalorder %s7, 1
    %p36 = por %p34, %p35
    %p37 = scmp.ne.s32.totalorder %s29, %s32
    %p38 = scmp.eq.s32.totalorder %s7, 0
    %p39 = por %p37, %p38
    %p40 = scmp.ne.s32.totalorder %s29, %s32
    %p41 = scmp.eq.s32.totalorder %s12, 1
    %p42 = por %p40, %p41
    %p43 = scmp.ne.s32.totalorder %s32, %s33
    %p44 = scmp.eq.s32.totalorder %s12, 0
    %p45 = por %p43, %p44
    %p46 = scmp.ne.s32.totalorder %s32, %s33
    %p47 = scmp.eq.s32.totalorder %s13, 1
    %p48 = por %p46, %p47
    %p50 = scmp.ne.s32.totalorder %s33, %s49
    %p51 = scmp.eq.s32.totalorder %s13, 0
    %p52 = por %p50, %p51
    %s53 = ssub.s32 %s14, %s26
    %s54 = ssub.s32 %s15, %s22
    %s55 = sor.u32 %s53, %s54
    %p56 = scmp.eq.s32.totalorder %s55, 0
    %s58 = sadd.s32 %s57, 1
    %s59 = scalar_select %p56, %s57, %s58
    %p62 = pneg %p56
    %p63 = scmp.eq.s32.totalorder %s7, 1
    %p64 = por %p62, %p63
    %p65 = scmp.ne.s32.totalorder %s57, %s60
    %p66 = scmp.eq.s32.totalorder %s7, 0
    %p67 = por %p65, %p66
    %p68 = scmp.ne.s32.totalorder %s57, %s60
    %p69 = scmp.eq.s32.totalorder %s12, 1
    %p70 = por %p68, %p69
    %p71 = scmp.ne.s32.totalorder %s60, %s61
    %p72 = scmp.eq.s32.totalorder %s12, 0
    %p73 = por %p71, %p72
    %p74 = scmp.ne.s32.totalorder %s60, %s61
    %p75 = scmp.eq.s32.totalorder %s13, 1
    %p76 = por %p74, %p75
    %p78 = scmp.ne.s32.totalorder %s61, %s77
    %p79 = scmp.eq.s32.totalorder %s13, 0
    %p80 = por %p78, %p79
    %p81 = scmp.le.s32.totalorder 1, %s7
    %p82 = scmp.lt.s32.totalorder %s7, 3
    %p83 = pnand %p81, %p82
    %p84 = pneg %p83
    // Predicated region
    $region9: #{global_se.3} parent=5 // pred_check
      _
    $region10: #{global_se.3} parent=5 // pred_check_branch
      %86 = sbr.rel (%p83) target = $region12
    $region11: #{global_se.3} parent=5 // pred_region
      %s87 = ssub.s32 %s7, 1
    $region12: #{global_se.3} parent=5 // pred_fallthru
      _
    %p88 = scmp.lt.s32.totalorder %s7, 2
    // Predicated region
    $region13: #{global_se.3} parent=5 // pred_check
      %p89 = pneg %p88
    $region14: #{global_se.3} parent=5 // pred_check_branch
      %91 = sbr.rel (%p89) target = $region16
    $region15: #{global_se.3} parent=5 // pred_region
      // Predicated region
      $region17: #{global_se.3} parent=15 // pred_check
        %p92 = pneg %p39
      $region18: #{global_se.3} parent=15 // pred_check_branch
        %94 = sbr.rel (%p92) target = $region20
      $region19: #{global_se.3} parent=15 // pred_region
        %s95 = smul.u32 8, %s14
        %p96 = scmp.lt.s32.totalorder %s95, 15
        %s97 = scalar_select %p96, %s95, 15
        %s98 = smul.addr %s97, 8
        %s99 = scalar_lea.vmem %s0, %s98
        %s100 = smul.u32 8, %s14
      $region20: #{global_se.3} parent=15 // pred_fallthru
        _
    $region16: #{global_se.3} parent=5 // pred_fallthru
      _
    %p101 = scmp.le.s32.totalorder 1, %s7
    %p102 = scmp.lt.s32.totalorder %s7, 3
    %p103 = pnand %p101, %p102
    %p104 = pneg %p103
    // Predicated region
    $region21: #{global_se.3} parent=5 // pred_check
      _
    $region22: #{global_se.3} parent=5 // pred_check_branch
      %106 = sbr.rel (%p103) target = $region24
    $region23: #{global_se.3} parent=5 // pred_region
      %s107 = ssub.s32 %s7, 1
      %s108 = smul.u32 8, %s16
      %p109 = scmp.lt.s32.totalorder %s108, 15
      %s110 = scalar_select %p109, %s108, 15
      %s111 = smul.addr %s110, 8
      %s112 = scalar_lea.vmem %s0, %s111
      %p113 = pneg %p45
      %p114 = pneg %p42
      %p115 = pneg %p73
      %p116 = pneg %p70
      %s117 = smul.u32 8, %s16
      %s118 = smul.u32 2, %s17
      %p119 = scmp.lt.s32.totalorder %s117, 15
      %s120 = scalar_select %p119, %s117, 15
      %p121 = scmp.lt.s32.totalorder %s118, 1
      %s122 = scalar_select %p121, %s118, 1
      %s123 = smul.addr %s120, 2
      %s124 = sadd.s32 %s122, %s123
      %s125 = smul.addr %s124, 8
      %s126 = scalar_lea.vmem %s1, %s125
      %s127 = smul.u32 8, %s16
      %p128 = scmp.lt.s32.totalorder %s127, 15
      %s129 = scalar_select %p128, %s127, 15
      %s130 = smul.addr %s129, 8
      %s131 = scalar_lea.vmem %s0, %s130
      %s132 = smul.u32 8, %s16
      %s133 = smul.u32 8, %s16
      %s134 = smul.u32 2, %s17
      %p135 = scmp.lt.s32.totalorder %s133, 15
      %s136 = scalar_select %p135, %s133, 15
      %p137 = scmp.lt.s32.totalorder %s134, 1
      %s138 = scalar_select %p137, %s134, 1
      %s139 = smul.addr %s136, 2
      %s140 = sadd.s32 %s138, %s139
      %s141 = smul.addr %s140, 8
      %s142 = scalar_lea.vmem %s1, %s141
      %s143 = smul.u32 8, %s16
      %s144 = smul.u32 2, %s17
      %v145 = vld [vmem:[%s131] sm:$0xff]
      %v146 = vld [vmem:[%s131 + $0x8] sm:$0xff]
      %v147 = vld [vmem:[%s131 + $0x10] sm:$0xff]
      %v148 = vld [vmem:[%s131 + $0x18] sm:$0xff]
      %v149 = vld [vmem:[%s131 + $0x20] sm:$0xff]
      %v150 = vld [vmem:[%s131 + $0x28] sm:$0xff]
      %v151 = vld [vmem:[%s131 + $0x30] sm:$0xff]
      %v152 = vld [vmem:[%s131 + $0x38] sm:$0xff]
      %154 = vset.pattern.permute.xlu0 0
      %155 = vperm.xlu0 %154, %v145
      %v156 = vpop.permute.xlu0 %155
      %159 = vset.pattern.permute.xlu0 0
      %160 = vperm.xlu0 %159, %v146
      %v161 = vpop.permute.xlu0 %160
      %164 = vset.pattern.permute.xlu0 0
      %165 = vperm.xlu0 %164, %v147
      %v166 = vpop.permute.xlu0 %165
      %169 = vset.pattern.permute.xlu0 0
      %170 = vperm.xlu0 %169, %v148
      %v171 = vpop.permute.xlu0 %170
      %174 = vset.pattern.permute.xlu0 0
      %175 = vperm.xlu0 %174, %v149
      %v176 = vpop.permute.xlu0 %175
      %179 = vset.pattern.permute.xlu0 0
      %180 = vperm.xlu0 %179, %v150
      %v181 = vpop.permute.xlu0 %180
      %184 = vset.pattern.permute.xlu0 0
      %185 = vperm.xlu0 %184, %v151
      %v186 = vpop.permute.xlu0 %185
      %189 = vset.pattern.permute.xlu0 0
      %190 = vperm.xlu0 %189, %v152
      %v191 = vpop.permute.xlu0 %190
      %193 = vst [vmem:[%s142] sm:$0xff] %v156
      %194 = vst [vmem:[%s142 + $0x8] sm:$0xff] %v156
      %195 = vst [vmem:[%s142 + $0x10] sm:$0xff] %v161
      %196 = vst [vmem:[%s142 + $0x18] sm:$0xff] %v161
      %197 = vst [vmem:[%s142 + $0x20] sm:$0xff] %v166
      %198 = vst [vmem:[%s142 + $0x28] sm:$0xff] %v166
      %199 = vst [vmem:[%s142 + $0x30] sm:$0xff] %v171
      %200 = vst [vmem:[%s142 + $0x38] sm:$0xff] %v171
      %201 = vst [vmem:[%s142 + $0x40] sm:$0xff] %v176
      %202 = vst [vmem:[%s142 + $0x48] sm:$0xff] %v176
      %203 = vst [vmem:[%s142 + $0x50] sm:$0xff] %v181
      %204 = vst [vmem:[%s142 + $0x58] sm:$0xff] %v181
      %205 = vst [vmem:[%s142 + $0x60] sm:$0xff] %v186
      %206 = vst [vmem:[%s142 + $0x68] sm:$0xff] %v186
      %207 = vst [vmem:[%s142 + $0x70] sm:$0xff] %v191
      %208 = vst [vmem:[%s142 + $0x78] sm:$0xff] %v191
      %s209 = smul.u32 8, %s16
      %s210 = smul.u32 2, %s17
      %p211 = scmp.lt.s32.totalorder %s209, 15
      %s212 = scalar_select %p211, %s209, 15
      %p213 = scmp.lt.s32.totalorder %s210, 1
      %s214 = scalar_select %p213, %s210, 1
      %s215 = smul.addr %s212, 2
      %s216 = sadd.s32 %s214, %s215
      %s217 = smul.addr %s216, 8
      %s218 = scalar_lea.vmem %s1, %s217
      // Predicated region
      $region25: #{global_se.3} parent=23 // pred_check
        %p219 = pneg %p70
      $region26: #{global_se.3} parent=23 // pred_check_branch
        %221 = sbr.rel (%p219) target = $region28
      $region27: #{global_se.3} parent=23 // pred_region
        %s222 = smul.u32 8, %s16
        %s223 = smul.u32 2, %s17
      $region28: #{global_se.3} parent=23 // pred_fallthru
        _
    $region24: #{global_se.3} parent=5 // pred_fallthru
      _
    %p224 = scmp.le.s32.totalorder 2, %s7
    // Predicated region
    $region29: #{global_se.3} parent=5 // pred_check
      %p225 = pneg %p224
    $region30: #{global_se.3} parent=5 // pred_check_branch
      %227 = sbr.rel (%p225) target = $region32
    $region31: #{global_se.3} parent=5 // pred_region
      %s228 = ssub.s32 %s7, 2
      // Predicated region
      $region33: #{global_se.3} parent=31 // pred_check
        %p229 = pneg %p76
      $region34: #{global_se.3} parent=31 // pred_check_branch
        %231 = sbr.rel (%p229) target = $region36
      $region35: #{global_se.3} parent=31 // pred_region
        %s232 = smul.u32 8, %s18
        %s233 = smul.u32 2, %s19
        %p234 = scmp.lt.s32.totalorder %s232, 15
        %s235 = scalar_select %p234, %s232, 15
        %p236 = scmp.lt.s32.totalorder %s233, 1
        %s237 = scalar_select %p236, %s233, 1
        %s238 = smul.addr %s235, 2
        %s239 = sadd.s32 %s237, %s238
        %s240 = smul.addr %s239, 8
        %s241 = scalar_lea.vmem %s1, %s240
      $region36: #{global_se.3} parent=31 // pred_fallthru
        _
    $region32: #{global_se.3} parent=5 // pred_fallthru
      _
  $region6: #{global_se.3} parent=0 // loop_footer
    %s11 = sadd.s32 1, %s7
  $region7: #{global_se.3} parent=0 // loop_footer_branch
    %6 = sbr.rel target = $region3
  $region8: #{global_se.3} parent=0 // loop_exit
    _

</llo_original>
